<compile_context>
chip_gen: v6e
topology: v6e:2x2x1
jax: 0.10.0
libtpu: 0.0.40
codegen_flags: <defaults>
</compile_context>

<pallas_src>
import math

import jax
import jax.numpy as jnp
from jax.experimental import pallas as pl
from jax.experimental.pallas import tpu as pltpu

# ---------------- configuration ----------------------------------------------
INPUT_SIZE = 8          # S : length of input time series
INPUT_DIM = 4           # D : input dimensionality
OUTPUT_DIM = 4          # output dimensionality (== input_dim here)
FORECAST_SIZE = 4       # forecast horizon H_f
LINEAR_LAYERS = 4       # number of Linear+ReLU layers
LAYER_SIZE = 32         # logical hidden width
BATCH = 256             # batch used in the demo below

FLAT_IN = INPUT_SIZE * INPUT_DIM                 # 32  backcast length (flattened)
FLAT_OUT = FORECAST_SIZE * OUTPUT_DIM            # 16  forecast length (flattened)
THETA_SIZE = FLAT_IN + FLAT_OUT                  # 48  generic-basis theta
LANE = 128                                       # lane-padded feature width
N_WEIGHTS = LINEAR_LAYERS + 1                    # 5 weight matrices
BIAS_ROWS = 8                                    # sublane-padded stacked bias slab


# ---------------- Pallas kernel ----------------------------------------------
def nbeats_block_kernel(x_ref, w_ref, b_ref, theta_ref):
    """Generic N-BEATS block on one (TILE, FLAT_IN) batch tile.

    x_ref    : (TILE, FLAT_IN)  f32   raw flattened input tile
    w_ref    : (5, 128, 128)    bf16  lane/row zero-padded stacked weights
    b_ref    : (8, 128)         f32   stacked biases (rows 5..7 zero)
    theta_ref: (TILE, 128)      bf16  lane-dense theta (lanes >= THETA_SIZE are 0)
    """
    h = x_ref[...].astype(jnp.bfloat16)                              # (TILE, 32)

    # Layer 0: only the first FLAT_IN rows of the padded weight are nonzero,
    # so dot against that slice directly (no activation lane-padding needed).
    acc = jnp.dot(h, w_ref[0, 0:FLAT_IN, :],
                  preferred_element_type=jnp.float32)                # (TILE, 128)
    h = jnp.maximum(acc + b_ref[0:1, :], 0.0).astype(jnp.bfloat16)

    # Hidden Linear + ReLU layers: bf16 MXU inputs, f32 accumulate / elementwise.
    for l in range(1, LINEAR_LAYERS):
        acc = jnp.dot(h, w_ref[l], preferred_element_type=jnp.float32)
        h = jnp.maximum(acc + b_ref[l:l + 1, :], 0.0).astype(jnp.bfloat16)

    # theta projection (no activation); single lane-dense bf16 store.
    acc = jnp.dot(h, w_ref[LINEAR_LAYERS], preferred_element_type=jnp.float32)
    theta_ref[...] = (acc + b_ref[LINEAR_LAYERS:LINEAR_LAYERS + 1, :]
                      ).astype(jnp.bfloat16)


# ---------------- parameter packing -------------------------------------------
def _pad2(a, rows, cols):
    return jnp.pad(a, ((0, rows - a.shape[0]), (0, cols - a.shape[1])))


def prepare_params(params):
    """Stack the 5 (w, b) pairs into one bf16 weight slab + one f32 bias slab.

    Zero padding is exact: padded weight rows/cols and padded bias lanes are
    zero, so padded theta lanes stay exactly zero through every ReLU.
    """
    ws, bs = [], []
    for (w, b) in params:
        ws.append(_pad2(w, LANE, LANE).astype(jnp.bfloat16))
        bs.append(_pad2(b, 1, LANE).astype(jnp.float32))
    w_stack = jnp.stack(ws, axis=0)                                  # (5,128,128)
    b_stack = jnp.concatenate(
        bs + [jnp.zeros((BIAS_ROWS - len(bs), LANE), jnp.float32)], axis=0)
    return w_stack, b_stack                                          # (8,128)


# ---------------- wrapper -----------------------------------------------------
@jax.jit
def nbeats_block(x, w_stack, b_stack):
    """x: (B, S, D) f32 -> (backcast (B, S, D), forecast (B, F, D_out))."""
    B = x.shape[0]
    x_flat = x.reshape(B, FLAT_IN)                     # cheap view; no HBM pad/cast

    # Two "parallel" batch tiles (one per TensorCore on v7x megacore); pad the
    # batch so the tile size is a sublane multiple and nothing is dropped.
    num_tiles = 2 if B >= 16 else 1
    tile = ((B + num_tiles - 1) // num_tiles + 7) // 8 * 8
    b_padded = tile * num_tiles
    if b_padded != B:
        x_flat = jnp.pad(x_flat, ((0, b_padded - B), (0, 0)))

    x_spec = pl.BlockSpec((tile, FLAT_IN), lambda i: (i, 0))
    w_spec = pl.BlockSpec((N_WEIGHTS, LANE, LANE), lambda i: (0, 0, 0))  # resident
    b_spec = pl.BlockSpec((BIAS_ROWS, LANE), lambda i: (0, 0))           # resident

    theta = pl.pallas_call(
        nbeats_block_kernel,
        out_shape=jax.ShapeDtypeStruct((b_padded, LANE), jnp.bfloat16),
        grid=(num_tiles,),
        in_specs=[x_spec, w_spec, b_spec],
        out_specs=pl.BlockSpec((tile, LANE), lambda i: (i, 0)),
        compiler_params=pltpu.CompilerParams(
            dimension_semantics=("parallel",)),        # megacore split on v7x
    )(x_flat, w_stack, b_stack)

    # Generic basis split + reshape + upcast in the wrapper (fuses for free).
    theta = theta[:B].astype(jnp.float32)
    backcast = theta[:, :FLAT_IN].reshape(B, INPUT_SIZE, INPUT_DIM)
    forecast = theta[:, FLAT_IN:THETA_SIZE].reshape(B, FORECAST_SIZE, OUTPUT_DIM)
    return backcast, forecast


# ---------------- deterministic parameter init (PyTorch Linear default) ------
def init_params(key):
    def linear(key, fan_in, fan_out):
        bound = 1.0 / math.sqrt(fan_in)
        kw, kb = jax.random.split(key)
        w = jax.random.uniform(kw, (fan_in, fan_out), jnp.float32, -bound, bound)
        b = jax.random.uniform(kb, (1, fan_out), jnp.float32, -bound, bound)
        return w, b

    keys = jax.random.split(key, LINEAR_LAYERS + 1)
    params = [linear(keys[0], FLAT_IN, LAYER_SIZE)]
    for i in range(1, LINEAR_LAYERS):
        params.append(linear(keys[i], LAYER_SIZE, LAYER_SIZE))
    params.append(linear(keys[LINEAR_LAYERS], LAYER_SIZE, THETA_SIZE))
    return params


# ---------------- pure-JAX references -----------------------------------------
def reference_bf16(x, w_stack, b_stack):
    """Same padded bf16-MXU / f32-accumulate / bf16-store math as the kernel."""
    B = x.shape[0]
    h = x.reshape(B, FLAT_IN).astype(jnp.bfloat16)
    acc = jnp.dot(h, w_stack[0, :FLAT_IN, :], preferred_element_type=jnp.float32)
    h = jnp.maximum(acc + b_stack[0:1, :], 0.0).astype(jnp.bfloat16)
    for l in range(1, LINEAR_LAYERS):
        acc = jnp.dot(h, w_stack[l], preferred_element_type=jnp.float32)
        h = jnp.maximum(acc + b_stack[l:l + 1, :], 0.0).astype(jnp.bfloat16)
    acc = jnp.dot(h, w_stack[LINEAR_LAYERS], preferred_element_type=jnp.float32)
    theta = (acc + b_stack[LINEAR_LAYERS:LINEAR_LAYERS + 1, :]
             ).astype(jnp.bfloat16).astype(jnp.float32)
    backcast = theta[:, :FLAT_IN].reshape(B, INPUT_SIZE, INPUT_DIM)
    forecast = theta[:, FLAT_IN:THETA_SIZE].reshape(B, FORECAST_SIZE, OUTPUT_DIM)
    return backcast, forecast


def reference_f32(x, params):
    """Full-precision reference of the original block math."""
    B = x.shape[0]
    h = x.reshape(B, FLAT_IN)
    for (w, b) in params[:-1]:
        h = jnp.maximum(h @ w + b, 0.0)
    wt, bt = params[-1]
    theta = h @ wt + bt
    backcast = theta[:, :FLAT_IN].reshape(B, INPUT_SIZE, INPUT_DIM)
    forecast = theta[:, FLAT_IN:].reshape(B, FORECAST_SIZE, OUTPUT_DIM)
    return backcast, forecast


if __name__ == "__main__":
    key = jax.random.PRNGKey(0)
    kx, kp = jax.random.split(key)
    x = jax.random.normal(kx, (BATCH, INPUT_SIZE, INPUT_DIM), jnp.float32)
    params = init_params(kp)
    w_stack, b_stack = prepare_params(params)

    backcast, forecast = nbeats_block(x, w_stack, b_stack)
    jax.block_until_ready((backcast, forecast))

    assert backcast.shape == (BATCH, INPUT_SIZE, INPUT_DIM)
    assert forecast.shape == (BATCH, FORECAST_SIZE, OUTPUT_DIM)

    # Exact-path comparison (same bf16 MXU / f32 accumulate / bf16 store math).
    ref_b, ref_f = reference_bf16(x, w_stack, b_stack)
    assert jnp.allclose(backcast, ref_b, atol=1e-2, rtol=1e-2)
    assert jnp.allclose(forecast, ref_f, atol=1e-2, rtol=1e-2)

    # Sanity check against the full-f32 reference (looser: bf16 matmul/store).
    f32_b, f32_f = reference_f32(x, params)
    assert jnp.allclose(backcast, f32_b, atol=5e-2, rtol=5e-2)
    assert jnp.allclose(forecast, f32_f, atol=5e-2, rtol=5e-2)

    print("KERNEL_OK")
</pallas_src>

<mosaic_0001>
module attributes {stable_mosaic.version = 11 : i64} {
  func.func @nbeats_block_kernel(%arg0: i32, %arg1: memref<128x32xf32, #tpu.memory_space<vmem>>, %arg2: memref<5x128x128xbf16, #tpu.memory_space<vmem>>, %arg3: memref<8x128xf32, #tpu.memory_space<vmem>>, %arg4: memref<128x128xbf16, #tpu.memory_space<vmem>>) attributes {dimension_semantics = [#tpu.dimension_semantics<parallel>], iteration_bounds = array<i64: 2>, scalar_prefetch = 0 : i64, scratch_operands = 0 : i64, tpu.core_type = #tpu.core_type<tc>, window_params = [{transform_indices = @transform_0, window_bounds = array<i64: 128, 32>}, {pipeline_mode = #tpu.pipeline_mode<synchronous>, transform_indices = @transform_1, window_bounds = array<i64: 5, 128, 128>}, {pipeline_mode = #tpu.pipeline_mode<synchronous>, transform_indices = @transform_2, window_bounds = array<i64: 8, 128>}, {transform_indices = @transform_3, window_bounds = array<i64: 128, 128>}]} {
    %c0 = arith.constant 0 : index
    %c0_0 = arith.constant 0 : index
    %0 = vector.load %arg1[%c0, %c0_0] : memref<128x32xf32, #tpu.memory_space<vmem>>, vector<128x32xf32>
    %1 = arith.truncf %0 : vector<128x32xf32> to vector<128x32xbf16>
    %c0_1 = arith.constant 0 : index
    %c0_2 = arith.constant 0 : index
    %c0_3 = arith.constant 0 : index
    %2 = vector.load %arg2[%c0_1, %c0_2, %c0_3] : memref<5x128x128xbf16, #tpu.memory_space<vmem>>, vector<1x32x128xbf16>
    %3 = vector.shape_cast %2 : vector<1x32x128xbf16> to vector<32x128xbf16>
    %cst = arith.constant dense<0.000000e+00> : vector<128x128xf32>
    %4 = tpu.matmul %1, %3, %cst {dimension_numbers = #tpu.dot_dimension_numbers<[1], [0], [0], [1], [0, 0, 1, 1], [], []>} : vector<128x32xbf16>, vector<32x128xbf16>, vector<128x128xf32> -> vector<128x128xf32>
    %c0_4 = arith.constant 0 : index
    %c0_5 = arith.constant 0 : index
    %5 = vector.load %arg3[%c0_4, %c0_5] : memref<8x128xf32, #tpu.memory_space<vmem>>, vector<1x128xf32>
    %6 = vector.broadcast %5 : vector<1x128xf32> to vector<128x128xf32>
    %7 = arith.addf %4, %6 : vector<128x128xf32>
    %cst_6 = arith.constant 0.000000e+00 : f32
    %8 = vector.broadcast %cst_6 : f32 to vector<128x128xf32>
    %9 = arith.maximumf %7, %8 : vector<128x128xf32>
    %10 = arith.truncf %9 : vector<128x128xf32> to vector<128x128xbf16>
    %c1 = arith.constant 1 : index
    %c0_7 = arith.constant 0 : index
    %c0_8 = arith.constant 0 : index
    %11 = vector.load %arg2[%c1, %c0_7, %c0_8] : memref<5x128x128xbf16, #tpu.memory_space<vmem>>, vector<1x128x128xbf16>
    %12 = vector.shape_cast %11 : vector<1x128x128xbf16> to vector<128x128xbf16>
    %cst_9 = arith.constant dense<0.000000e+00> : vector<128x128xf32>
    %13 = tpu.matmul %10, %12, %cst_9 {dimension_numbers = #tpu.dot_dimension_numbers<[1], [0], [0], [1], [0, 0, 1, 1], [], []>} : vector<128x128xbf16>, vector<128x128xbf16>, vector<128x128xf32> -> vector<128x128xf32>
    %c1_10 = arith.constant 1 : index
    %c0_11 = arith.constant 0 : index
    %14 = vector.load %arg3[%c1_10, %c0_11] : memref<8x128xf32, #tpu.memory_space<vmem>>, vector<1x128xf32>
    %15 = vector.broadcast %14 : vector<1x128xf32> to vector<128x128xf32>
    %16 = arith.addf %13, %15 : vector<128x128xf32>
    %cst_12 = arith.constant 0.000000e+00 : f32
    %17 = vector.broadcast %cst_12 : f32 to vector<128x128xf32>
    %18 = arith.maximumf %16, %17 : vector<128x128xf32>
    %19 = arith.truncf %18 : vector<128x128xf32> to vector<128x128xbf16>
    %c2 = arith.constant 2 : index
    %c0_13 = arith.constant 0 : index
    %c0_14 = arith.constant 0 : index
    %20 = vector.load %arg2[%c2, %c0_13, %c0_14] : memref<5x128x128xbf16, #tpu.memory_space<vmem>>, vector<1x128x128xbf16>
    %21 = vector.shape_cast %20 : vector<1x128x128xbf16> to vector<128x128xbf16>
    %cst_15 = arith.constant dense<0.000000e+00> : vector<128x128xf32>
    %22 = tpu.matmul %19, %21, %cst_15 {dimension_numbers = #tpu.dot_dimension_numbers<[1], [0], [0], [1], [0, 0, 1, 1], [], []>} : vector<128x128xbf16>, vector<128x128xbf16>, vector<128x128xf32> -> vector<128x128xf32>
    %c2_16 = arith.constant 2 : index
    %c0_17 = arith.constant 0 : index
    %23 = vector.load %arg3[%c2_16, %c0_17] : memref<8x128xf32, #tpu.memory_space<vmem>>, vector<1x128xf32>
    %24 = vector.broadcast %23 : vector<1x128xf32> to vector<128x128xf32>
    %25 = arith.addf %22, %24 : vector<128x128xf32>
    %cst_18 = arith.constant 0.000000e+00 : f32
    %26 = vector.broadcast %cst_18 : f32 to vector<128x128xf32>
    %27 = arith.maximumf %25, %26 : vector<128x128xf32>
    %28 = arith.truncf %27 : vector<128x128xf32> to vector<128x128xbf16>
    %c3 = arith.constant 3 : index
    %c0_19 = arith.constant 0 : index
    %c0_20 = arith.constant 0 : index
    %29 = vector.load %arg2[%c3, %c0_19, %c0_20] : memref<5x128x128xbf16, #tpu.memory_space<vmem>>, vector<1x128x128xbf16>
    %30 = vector.shape_cast %29 : vector<1x128x128xbf16> to vector<128x128xbf16>
    %cst_21 = arith.constant dense<0.000000e+00> : vector<128x128xf32>
    %31 = tpu.matmul %28, %30, %cst_21 {dimension_numbers = #tpu.dot_dimension_numbers<[1], [0], [0], [1], [0, 0, 1, 1], [], []>} : vector<128x128xbf16>, vector<128x128xbf16>, vector<128x128xf32> -> vector<128x128xf32>
    %c3_22 = arith.constant 3 : index
    %c0_23 = arith.constant 0 : index
    %32 = vector.load %arg3[%c3_22, %c0_23] : memref<8x128xf32, #tpu.memory_space<vmem>>, vector<1x128xf32>
    %33 = vector.broadcast %32 : vector<1x128xf32> to vector<128x128xf32>
    %34 = arith.addf %31, %33 : vector<128x128xf32>
    %cst_24 = arith.constant 0.000000e+00 : f32
    %35 = vector.broadcast %cst_24 : f32 to vector<128x128xf32>
    %36 = arith.maximumf %34, %35 : vector<128x128xf32>
    %37 = arith.truncf %36 : vector<128x128xf32> to vector<128x128xbf16>
    %c4 = arith.constant 4 : index
    %c0_25 = arith.constant 0 : index
    %c0_26 = arith.constant 0 : index
    %38 = vector.load %arg2[%c4, %c0_25, %c0_26] : memref<5x128x128xbf16, #tpu.memory_space<vmem>>, vector<1x128x128xbf16>
    %39 = vector.shape_cast %38 : vector<1x128x128xbf16> to vector<128x128xbf16>
    %cst_27 = arith.constant dense<0.000000e+00> : vector<128x128xf32>
    %40 = tpu.matmul %37, %39, %cst_27 {dimension_numbers = #tpu.dot_dimension_numbers<[1], [0], [0], [1], [0, 0, 1, 1], [], []>} : vector<128x128xbf16>, vector<128x128xbf16>, vector<128x128xf32> -> vector<128x128xf32>
    %c4_28 = arith.constant 4 : index
    %c0_29 = arith.constant 0 : index
    %41 = vector.load %arg3[%c4_28, %c0_29] : memref<8x128xf32, #tpu.memory_space<vmem>>, vector<1x128xf32>
    %42 = vector.broadcast %41 : vector<1x128xf32> to vector<128x128xf32>
    %43 = arith.addf %40, %42 : vector<128x128xf32>
    %44 = arith.truncf %43 : vector<128x128xf32> to vector<128x128xbf16>
    %c0_30 = arith.constant 0 : index
    %c0_31 = arith.constant 0 : index
    %45 = vector.load %arg4[%c0_30, %c0_31] : memref<128x128xbf16, #tpu.memory_space<vmem>>, vector<128x128xbf16>
    tpu.vector_store %arg4[%c0_30, %c0_31], %44 {strides = array<i32>} : memref<128x128xbf16, #tpu.memory_space<vmem>>, vector<128x128xbf16>,
    return
  }
  func.func @transform_0(%arg0: i32) -> (i32, i32) {
    %c0_i32 = arith.constant 0 : i32
    %c0_i32_0 = arith.constant 0 : i32
    return %arg0, %c0_i32 : i32, i32
  }
  func.func @transform_1(%arg0: i32) -> (i32, i32, i32) {
    %c0_i32 = arith.constant 0 : i32
    %c0_i32_0 = arith.constant 0 : i32
    %c0_i32_1 = arith.constant 0 : i32
    %c0_i32_2 = arith.constant 0 : i32
    return %c0_i32, %c0_i32_0, %c0_i32_1 : i32, i32, i32
  }
  func.func @transform_2(%arg0: i32) -> (i32, i32) {
    %c0_i32 = arith.constant 0 : i32
    %c0_i32_0 = arith.constant 0 : i32
    %c0_i32_1 = arith.constant 0 : i32
    return %c0_i32, %c0_i32_0 : i32, i32
  }
  func.func @transform_3(%arg0: i32) -> (i32, i32) {
    %c0_i32 = arith.constant 0 : i32
    %c0_i32_0 = arith.constant 0 : i32
    return %arg0, %c0_i32 : i32, i32
  }
}

</mosaic_0001>

<llo_original>
// kernel: nbeats_block.1
$region0: #{nbeats_block.1}
  #allocation0 [shape = 'u32[]', space=smem, size = 0x4, offset = 0x4, fixed_abs, tag = 'smem constant byte address 0x4 - core index']
  #allocation1 [shape = 'u32[144,128]{1,0:T(1,128)}', space=vmem, size = 0x12000, scoped, tag = 'internal scratch']
  %s0 = inlined_call_operand.vmem [shape: f32[256,32], index: 0, kind: input, shape index: {}]
  %s1 = inlined_call_operand.vmem [shape: bf16[5,128,128], index: 1, kind: input, shape index: {}]
  %s2 = inlined_call_operand.vmem [shape: f32[8,128], index: 2, kind: input, shape index: {}]
  %s3 = inlined_call_operand.vmem [shape: bf16[256,128], index: 3, kind: output, shape index: {}]
  %s4 = sld [smem:[#allocation0]]
  $region45: #{nbeats_block.1} parent=0
    _
  %s6 = ssub.s32 1, %s4
  %s7 = scalar_select 0, %s6, %s4
  loop: start=0, step=1, limit=4
  $region2: #{nbeats_block.1} parent=0 // loop_pre_header
    _
  $region3: #{nbeats_block.1} parent=0 // loop_header
    %s9 = sphi 0, %s13
    %p10 = scmp.ge.s32.totalorder %s9, 4
    %s19 = sphi 0, %s21
    %s22 = sphi 0, %s19
    %s23 = sphi 0, %s22
    %s39 = sphi 0, %s23
    %s43 = sphi 0, %s43
    %s45 = sphi 0, %s43
    %s46 = sphi 0, %s45
    %s60 = sphi 0, %s46
    %s64 = sphi 0, %s64
    %s66 = sphi 0, %s64
    %s67 = sphi 0, %s66
    %s81 = sphi 0, %s67
    %s87 = sphi 0, %s89
    %s90 = sphi 0, %s87
    %s91 = sphi 0, %s90
    %s107 = sphi 0, %s91
  $region4: #{nbeats_block.1} parent=0 // loop_header_branch
    %12 = sbr.rel (%p10) target = $region8
  $region5: #{nbeats_block.1} parent=0 // loop_body
    %s14 = ssub.s32 %s9, 1
    %s15 = ssub.s32 %s9, 2
    %s16 = sadd.s32 %s9, 1
    %s17 = ssub.s32 %s9, %s16
    %p18 = scmp.eq.s32.totalorder %s17, 0
    %s20 = sadd.s32 %s19, 1
    %s21 = scalar_select %p18, %s19, %s20
    %p24 = pneg %p18
    %p25 = scmp.eq.s32.totalorder %s9, 1
    %p26 = por %p24, %p25
    %p27 = scmp.ne.s32.totalorder %s19, %s22
    %p28 = scmp.eq.s32.totalorder %s9, 0
    %p29 = por %p27, %p28
    %p30 = scmp.ne.s32.totalorder %s19, %s22
    %p31 = scmp.eq.s32.totalorder %s14, 1
    %p32 = por %p30, %p31
    %p33 = scmp.ne.s32.totalorder %s22, %s23
    %p34 = scmp.eq.s32.totalorder %s14, 0
    %p35 = por %p33, %p34
    %p36 = scmp.ne.s32.totalorder %s22, %s23
    %p37 = scmp.eq.s32.totalorder %s15, 1
    %p38 = por %p36, %p37
    %p40 = scmp.ne.s32.totalorder %s23, %s39
    %p41 = scmp.eq.s32.totalorder %s15, 0
    %p42 = por %p40, %p41
    %s44 = sadd.s32 %s43, 1
    %p47 = scmp.eq.s32.totalorder %s9, 1
    %p48 = scmp.ne.s32.totalorder %s43, %s45
    %p49 = scmp.eq.s32.totalorder %s9, 0
    %p50 = por %p48, %p49
    %p51 = scmp.ne.s32.totalorder %s43, %s45
    %p52 = scmp.eq.s32.totalorder %s14, 1
    %p53 = por %p51, %p52
    %p54 = scmp.ne.s32.totalorder %s45, %s46
    %p55 = scmp.eq.s32.totalorder %s14, 0
    %p56 = por %p54, %p55
    %p57 = scmp.ne.s32.totalorder %s45, %s46
    %p58 = scmp.eq.s32.totalorder %s15, 1
    %p59 = por %p57, %p58
    %p61 = scmp.ne.s32.totalorder %s46, %s60
    %p62 = scmp.eq.s32.totalorder %s15, 0
    %p63 = por %p61, %p62
    %s65 = sadd.s32 %s64, 1
    %p68 = scmp.eq.s32.totalorder %s9, 1
    %p69 = scmp.ne.s32.totalorder %s64, %s66
    %p70 = scmp.eq.s32.totalorder %s9, 0
    %p71 = por %p69, %p70
    %p72 = scmp.ne.s32.totalorder %s64, %s66
    %p73 = scmp.eq.s32.totalorder %s14, 1
    %p74 = por %p72, %p73
    %p75 = scmp.ne.s32.totalorder %s66, %s67
    %p76 = scmp.eq.s32.totalorder %s14, 0
    %p77 = por %p75, %p76
    %p78 = scmp.ne.s32.totalorder %s66, %s67
    %p79 = scmp.eq.s32.totalorder %s15, 1
    %p80 = por %p78, %p79
    %p82 = scmp.ne.s32.totalorder %s67, %s81
    %p83 = scmp.eq.s32.totalorder %s15, 0
    %p84 = por %p82, %p83
    %s85 = ssub.s32 %s9, %s16
    %p86 = scmp.eq.s32.totalorder %s85, 0
    %s88 = sadd.s32 %s87, 1
    %s89 = scalar_select %p86, %s87, %s88
    %p92 = pneg %p86
    %p93 = scmp.eq.s32.totalorder %s9, 1
    %p94 = por %p92, %p93
    %p95 = scmp.ne.s32.totalorder %s87, %s90
    %p96 = scmp.eq.s32.totalorder %s9, 0
    %p97 = por %p95, %p96
    %p98 = scmp.ne.s32.totalorder %s87, %s90
    %p99 = scmp.eq.s32.totalorder %s14, 1
    %p100 = por %p98, %p99
    %p101 = scmp.ne.s32.totalorder %s90, %s91
    %p102 = scmp.eq.s32.totalorder %s14, 0
    %p103 = por %p101, %p102
    %p104 = scmp.ne.s32.totalorder %s90, %s91
    %p105 = scmp.eq.s32.totalorder %s15, 1
    %p106 = por %p104, %p105
    %p108 = scmp.ne.s32.totalorder %s91, %s107
    %p109 = scmp.eq.s32.totalorder %s15, 0
    %p110 = por %p108, %p109
    %p111 = scmp.le.s32.totalorder 1, %s9
    %p112 = scmp.lt.s32.totalorder %s9, 3
    %p113 = pnand %p111, %p112
    %p114 = pneg %p113
    // Predicated region
    $region9: #{nbeats_block.1} parent=5 // pred_check
      _
    $region10: #{nbeats_block.1} parent=5 // pred_check_branch
      %116 = sbr.rel (%p113) target = $region12
    $region11: #{nbeats_block.1} parent=5 // pred_region
      %s117 = ssub.s32 %s9, 1
      // Predicated region
      $region13: #{nbeats_block.1} parent=11 // pred_check
        %p118 = pneg %p56
      $region14: #{nbeats_block.1} parent=11 // pred_check_branch
        %120 = sbr.rel (%p118) target = $region16
      $region15: #{nbeats_block.1} parent=11 // pred_region
        _
      $region16: #{nbeats_block.1} parent=11 // pred_fallthru
        _
      // Predicated region
      $region17: #{nbeats_block.1} parent=11 // pred_check
        %p121 = pneg %p77
      $region18: #{nbeats_block.1} parent=11 // pred_check_branch
        %123 = sbr.rel (%p121) target = $region20
      $region19: #{nbeats_block.1} parent=11 // pred_region
        _
      $region20: #{nbeats_block.1} parent=11 // pred_fallthru
        _
    $region12: #{nbeats_block.1} parent=5 // pred_fallthru
      _
    %p124 = scmp.lt.s32.totalorder %s9, 2
    // Predicated region
    $region21: #{nbeats_block.1} parent=5 // pred_check
      %p125 = pneg %p124
    $region22: #{nbeats_block.1} parent=5 // pred_check_branch
      %127 = sbr.rel (%p125) target = $region24
    $region23: #{nbeats_block.1} parent=5 // pred_region
      // Predicated region
      $region25: #{nbeats_block.1} parent=23 // pred_check
        %p128 = pneg %p29
      $region26: #{nbeats_block.1} parent=23 // pred_check_branch
        %130 = sbr.rel (%p128) target = $region28
      $region27: #{nbeats_block.1} parent=23 // pred_region
        %s131 = smul.u32 16, %s9
        %p132 = scmp.lt.s32.totalorder %s131, 31
        %s133 = scalar_select %p132, %s131, 31
        %s134 = smul.addr %s133, 8
        %s135 = scalar_lea.vmem %s0, %s134
        %s136 = smul.u32 16, %s9
      $region28: #{nbeats_block.1} parent=23 // pred_fallthru
        _
    $region24: #{nbeats_block.1} parent=5 // pred_fallthru
      _
    %p137 = scmp.le.s32.totalorder 1, %s9
    %p138 = scmp.lt.s32.totalorder %s9, 3
    %p139 = pnand %p137, %p138
    %p140 = pneg %p139
    // Predicated region
    $region29: #{nbeats_block.1} parent=5 // pred_check
      _
    $region30: #{nbeats_block.1} parent=5 // pred_check_branch
      %142 = sbr.rel (%p139) target = $region32
    $region31: #{nbeats_block.1} parent=5 // pred_region
      %s143 = ssub.s32 %s9, 1
      %s144 = smul.u32 16, %s14
      %p145 = scmp.lt.s32.totalorder %s144, 31
      %s146 = scalar_select %p145, %s144, 31
      %s147 = smul.addr %s146, 8
      %s148 = scalar_lea.vmem %s0, %s147
      %p149 = pneg %p35
      %p150 = pneg %p32
      %p151 = pneg %p56
      %p152 = pneg %p53
      %p153 = pneg %p77
      %p154 = pneg %p74
      %p155 = pneg %p103
      %p156 = pneg %p100
      %s157 = smul.u32 16, %s14
      %p158 = scmp.lt.s32.totalorder %s157, 31
      %s159 = scalar_select %p158, %s157, 31
      %s160 = smul.addr %s159, 4
      %s161 = scalar_lea.vmem %s3, %s160
      %s162 = smul.u32 16, %s14
      %p163 = scmp.lt.s32.totalorder %s162, 31
      %s164 = scalar_select %p163, %s162, 31
      %s165 = smul.addr %s164, 8
      %s166 = scalar_lea.vmem %s0, %s165
      %s167 = smul.u32 16, %s14
      %s168 = smul.u32 16, %s14
      %p169 = scmp.lt.s32.totalorder %s168, 31
      %s170 = scalar_select %p169, %s168, 31
      %s171 = smul.addr %s170, 4
      %s172 = scalar_lea.vmem %s3, %s171
      %s173 = smul.u32 16, %s14
      %v175 = vld [vmem:[%s166] sm:$0xff]
      %v176 = vld [vmem:[%s166 + $0x8] sm:$0xff]
      %v177 = vld [vmem:[%s166 + $0x10] sm:$0xff]
      %v178 = vld [vmem:[%s166 + $0x18] sm:$0xff]
      %v179 = vld [vmem:[%s166 + $0x20] sm:$0xff]
      %v180 = vld [vmem:[%s166 + $0x28] sm:$0xff]
      %v181 = vld [vmem:[%s166 + $0x30] sm:$0xff]
      %v182 = vld [vmem:[%s166 + $0x38] sm:$0xff]
      %v183 = vld [vmem:[%s166 + $0x40] sm:$0xff]
      %v184 = vld [vmem:[%s166 + $0x48] sm:$0xff]
      %v185 = vld [vmem:[%s166 + $0x50] sm:$0xff]
      %v186 = vld [vmem:[%s166 + $0x58] sm:$0xff]
      %v187 = vld [vmem:[%s166 + $0x60] sm:$0xff]
      %v188 = vld [vmem:[%s166 + $0x68] sm:$0xff]
      %v189 = vld [vmem:[%s166 + $0x70] sm:$0xff]
      %v190 = vld [vmem:[%s166 + $0x78] sm:$0xff]
      %v191 = vpack.c.bf16 %v176, %v175
      %v192 = vpack.c.bf16 %v178, %v177
      %v193 = vpack.c.bf16 %v180, %v179
      %v194 = vpack.c.bf16 %v182, %v181
      %v195 = vpack.c.bf16 %v184, %v183
      %v196 = vpack.c.bf16 %v186, %v185
      %v197 = vpack.c.bf16 %v188, %v187
      %v198 = vpack.c.bf16 %v190, %v189
      %v199 = vld [vmem:[%s1] sm:$0xf]
      %v200 = vld [vmem:[%s1 + $0x4] sm:$0xf]
      %v201 = vld [vmem:[%s1 + $0x8] sm:$0xf]
      %v202 = vld [vmem:[%s1 + $0xc] sm:$0xf]
      %v203 = vld [vmem:[%s2] sm:$0x1]
      %v204 = vlaneseq
      %v205 = vshrl.u32 %v204, 7
      %v206 = vsub.s32 0, %v205
      %v207 = vrot.slane %v203, %v206
      %v212 = vunpack.c.l.b16 %v199
      %v213 = vunpack.c.l.b16 %v200
      %v214 = vunpack.c.l.b16 %v201
      %v215 = vunpack.c.l.b16 %v202
      %v216 = vpack.c.b16 %v213, %v212
      %v217 = vpack.c.b16 %v215, %v214
      %vm220 = vcmask 261120
      %v222 = vsel %vm220, %v191, 0
      %v225 = vsel %vm220, %v192, 0
      %v228 = vsel %vm220, %v193, 0
      %v231 = vsel %vm220, %v194, 0
      %v234 = vsel %vm220, %v195, 0
      %v237 = vsel %vm220, %v196, 0
      %v240 = vsel %vm220, %v197, 0
      %v243 = vsel %vm220, %v198, 0
      %245 = vmatprep.subr.bf16.mxu0 0
      %246 = vmatpush1.bf16.msra.mxu0 0
      %247 = vmatprep.subr.bf16.mxu0 0
      %248 = vmatpush1.bf16.msra.mxu0 0
      %249 = vmatprep.subr.bf16.mxu0 0
      %250 = vmatpush1.bf16.msra.mxu0 0
      %251 = vmatprep.subr.bf16.mxu0 0
      %252 = vmatpush1.bf16.msra.mxu0 0
      %253 = vmatprep.subr.bf16.mxu0 0
      %254 = vmatpush1.bf16.msra.mxu0 0
      %255 = vmatprep.subr.bf16.mxu0 0
      %256 = vmatpush1.bf16.msra.mxu0 0
      %257 = vmatprep.subr.bf16.mxu0 0
      %258 = vmatpush1.bf16.msra.mxu0 %v217
      %259 = vmatprep.subr.bf16.mxu0 0
      %260 = vmatpush1.bf16.msra.mxu0 %v216
      %261 = vmatprep.subr.bf16.mxu0 0
      %262 = vmatpush2.bf16.msra.mxu0 0
      %263 = vmatprep.subr.bf16.mxu0 0
      %264 = vmatpush2.bf16.msra.mxu0 0
      %265 = vmatprep.subr.bf16.mxu0 0
      %266 = vmatpush2.bf16.msra.mxu0 0
      %267 = vmatprep.subr.bf16.mxu0 0
      %268 = vmatpush2.bf16.msra.mxu0 0
      %269 = vmatprep.subr.bf16.mxu0 0
      %270 = vmatpush2.bf16.msra.mxu0 0
      %271 = vmatprep.subr.bf16.mxu0 0
      %272 = vmatpush2.bf16.msra.mxu0 0
      %273 = vmatprep.subr.bf16.mxu0 0
      %274 = vmatpush2.bf16.msra.mxu0 0
      %275 = vmatprep.subr.bf16.mxu0 0
      %276 = vmatpush2.bf16.msra.mxu0 0
      %277 = vmatprep.mubr.bf16.mxu0 0
      %278 = vmatmul.mubr.bf16.gmra.mxu0 %v222
      %v279 = vpop.f32.mrf.mxu0
      %v280 = vadd.f32 %v207, %v279
      %v281 = vpop.f32.mrf.mxu0
      %v282 = vpop.f32.mrf.mxu0
      %v283 = vadd.f32 %v207, %v282
      %v284 = vpop.f32.mrf.mxu0
      %285 = vmatprep.mubr.bf16.mxu0 0
      %286 = vmatmul.mubr.bf16.gmra.mxu0 %v225
      %v287 = vpop.f32.mrf.mxu0
      %v288 = vadd.f32 %v207, %v287
      %v289 = vpop.f32.mrf.mxu0
      %v290 = vpop.f32.mrf.mxu0
      %v291 = vadd.f32 %v207, %v290
      %v292 = vpop.f32.mrf.mxu0
      %293 = vmatprep.mubr.bf16.mxu0 0
      %294 = vmatmul.mubr.bf16.gmra.mxu0 %v228
      %v295 = vpop.f32.mrf.mxu0
      %v296 = vadd.f32 %v207, %v295
      %v297 = vpop.f32.mrf.mxu0
      %v298 = vpop.f32.mrf.mxu0
      %v299 = vadd.f32 %v207, %v298
      %v300 = vpop.f32.mrf.mxu0
      %301 = vmatprep.mubr.bf16.mxu0 0
      %302 = vmatmul.mubr.bf16.gmra.mxu0 %v231
      %v303 = vpop.f32.mrf.mxu0
      %v304 = vadd.f32 %v207, %v303
      %v305 = vpop.f32.mrf.mxu0
      %v306 = vpop.f32.mrf.mxu0
      %v307 = vadd.f32 %v207, %v306
      %v308 = vpop.f32.mrf.mxu0
      %309 = vmatprep.mubr.bf16.mxu0 0
      %310 = vmatmul.mubr.bf16.gmra.mxu0 %v234
      %v311 = vpop.f32.mrf.mxu0
      %v312 = vadd.f32 %v207, %v311
      %v313 = vpop.f32.mrf.mxu0
      %v314 = vpop.f32.mrf.mxu0
      %v315 = vadd.f32 %v207, %v314
      %v316 = vpop.f32.mrf.mxu0
      %317 = vmatprep.mubr.bf16.mxu0 0
      %318 = vmatmul.mubr.bf16.gmra.mxu0 %v237
      %v319 = vpop.f32.mrf.mxu0
      %v320 = vadd.f32 %v207, %v319
      %v321 = vpop.f32.mrf.mxu0
      %v322 = vpop.f32.mrf.mxu0
      %v323 = vadd.f32 %v207, %v322
      %v324 = vpop.f32.mrf.mxu0
      %325 = vmatprep.mubr.bf16.mxu0 0
      %326 = vmatmul.mubr.bf16.gmra.mxu0 %v240
      %v327 = vpop.f32.mrf.mxu0
      %v328 = vadd.f32 %v207, %v327
      %v329 = vpop.f32.mrf.mxu0
      %v330 = vpop.f32.mrf.mxu0
      %v331 = vadd.f32 %v207, %v330
      %v332 = vpop.f32.mrf.mxu0
      %333 = vmatprep.mubr.bf16.mxu0 0
      %334 = vmatmul.mubr.bf16.gmra.mxu0 %v243
      %v335 = vpop.f32.mrf.mxu0
      %v336 = vadd.f32 %v207, %v335
      %v337 = vpop.f32.mrf.mxu0
      %v338 = vpop.f32.mrf.mxu0
      %v339 = vadd.f32 %v207, %v338
      %v340 = vpop.f32.mrf.mxu0
      %341 = vdwg.mxu0
      %v342 = vmax.f32 %v280, 0.0
      %v343 = vmax.f32 %v283, 0.0
      %v344 = vmax.f32 %v288, 0.0
      %v345 = vmax.f32 %v291, 0.0
      %v346 = vmax.f32 %v296, 0.0
      %v347 = vmax.f32 %v299, 0.0
      %v348 = vmax.f32 %v304, 0.0
      %v349 = vmax.f32 %v307, 0.0
      %v350 = vmax.f32 %v312, 0.0
      %v351 = vmax.f32 %v315, 0.0
      %v352 = vmax.f32 %v320, 0.0
      %v353 = vmax.f32 %v323, 0.0
      %v354 = vmax.f32 %v328, 0.0
      %v355 = vmax.f32 %v331, 0.0
      %v356 = vmax.f32 %v336, 0.0
      %v357 = vmax.f32 %v339, 0.0
      %v358 = vpack.c.bf16 %v343, %v342
      %v359 = vpack.c.bf16 %v345, %v344
      %v360 = vpack.c.bf16 %v347, %v346
      %v361 = vpack.c.bf16 %v349, %v348
      %v362 = vpack.c.bf16 %v351, %v350
      %v363 = vpack.c.bf16 %v353, %v352
      %v364 = vpack.c.bf16 %v355, %v354
      %v365 = vpack.c.bf16 %v357, %v356
      %s366 = scalar_lea.vmem %s1, 64
      %v367 = vld [vmem:[%s366] sm:$0xf]
      %v368 = vld [vmem:[%s366 + $0x4] sm:$0xf]
      %v369 = vld [vmem:[%s366 + $0x8] sm:$0xf]
      %v370 = vld [vmem:[%s366 + $0xc] sm:$0xf]
      %v371 = vld [vmem:[%s366 + $0x10] sm:$0xf]
      %v372 = vld [vmem:[%s366 + $0x14] sm:$0xf]
      %v373 = vld [vmem:[%s366 + $0x18] sm:$0xf]
      %v374 = vld [vmem:[%s366 + $0x1c] sm:$0xf]
      %v375 = vld [vmem:[%s366 + $0x20] sm:$0xf]
      %v376 = vld [vmem:[%s366 + $0x24] sm:$0xf]
      %v377 = vld [vmem:[%s366 + $0x28] sm:$0xf]
      %v378 = vld [vmem:[%s366 + $0x2c] sm:$0xf]
      %v379 = vld [vmem:[%s366 + $0x30] sm:$0xf]
      %v380 = vld [vmem:[%s366 + $0x34] sm:$0xf]
      %v381 = vld [vmem:[%s366 + $0x38] sm:$0xf]
      %v382 = vld [vmem:[%s366 + $0x3c] sm:$0xf]
      %v383 = vld [vmem:[%s2 + $0x1] sm:$0x1]
      %v384 = vlaneseq
      %v385 = vshrl.u32 %v384, 7
      %v386 = vsub.s32 0, %v385
      %v387 = vrot.slane %v383, %v386
      %v404 = vunpack.c.l.b16 %v367
      %v405 = vunpack.c.l.b16 %v368
      %v406 = vunpack.c.l.b16 %v369
      %v407 = vunpack.c.l.b16 %v370
      %v408 = vunpack.c.l.b16 %v371
      %v409 = vunpack.c.l.b16 %v372
      %v410 = vunpack.c.l.b16 %v373
      %v411 = vunpack.c.l.b16 %v374
      %v412 = vunpack.c.l.b16 %v375
      %v413 = vunpack.c.l.b16 %v376
      %v414 = vunpack.c.l.b16 %v377
      %v415 = vunpack.c.l.b16 %v378
      %v416 = vunpack.c.l.b16 %v379
      %v417 = vunpack.c.l.b16 %v380
      %v418 = vunpack.c.l.b16 %v381
      %v419 = vunpack.c.l.b16 %v382
      %v420 = vpack.c.b16 %v405, %v404
      %v421 = vpack.c.b16 %v407, %v406
      %v422 = vpack.c.b16 %v409, %v408
      %v423 = vpack.c.b16 %v411, %v410
      %v424 = vpack.c.b16 %v413, %v412
      %v425 = vpack.c.b16 %v415, %v414
      %v426 = vpack.c.b16 %v417, %v416
      %v427 = vpack.c.b16 %v419, %v418
      %436 = vmatprep.subr.bf16.mxu0 0
      %437 = vmatpush1.bf16.msra.mxu0 %v427
      %438 = vmatprep.subr.bf16.mxu0 0
      %439 = vmatpush1.bf16.msra.mxu0 %v426
      %440 = vmatprep.subr.bf16.mxu0 0
      %441 = vmatpush1.bf16.msra.mxu0 %v425
      %442 = vmatprep.subr.bf16.mxu0 0
      %443 = vmatpush1.bf16.msra.mxu0 %v424
      %444 = vmatprep.subr.bf16.mxu0 0
      %445 = vmatpush1.bf16.msra.mxu0 %v423
      %446 = vmatprep.subr.bf16.mxu0 0
      %447 = vmatpush1.bf16.msra.mxu0 %v422
      %448 = vmatprep.subr.bf16.mxu0 0
      %449 = vmatpush1.bf16.msra.mxu0 %v421
      %450 = vmatprep.subr.bf16.mxu0 0
      %451 = vmatpush1.bf16.msra.mxu0 %v420
      %452 = vmatprep.subr.bf16.mxu0 0
      %453 = vmatpush2.bf16.msra.mxu0 0
      %454 = vmatprep.subr.bf16.mxu0 0
      %455 = vmatpush2.bf16.msra.mxu0 0
      %456 = vmatprep.subr.bf16.mxu0 0
      %457 = vmatpush2.bf16.msra.mxu0 0
      %458 = vmatprep.subr.bf16.mxu0 0
      %459 = vmatpush2.bf16.msra.mxu0 0
      %460 = vmatprep.subr.bf16.mxu0 0
      %461 = vmatpush2.bf16.msra.mxu0 0
      %462 = vmatprep.subr.bf16.mxu0 0
      %463 = vmatpush2.bf16.msra.mxu0 0
      %464 = vmatprep.subr.bf16.mxu0 0
      %465 = vmatpush2.bf16.msra.mxu0 0
      %466 = vmatprep.subr.bf16.mxu0 0
      %467 = vmatpush2.bf16.msra.mxu0 0
      %468 = vmatprep.mubr.bf16.mxu0 0
      %469 = vmatmul.mubr.bf16.gmra.mxu0 %v358
      %v470 = vpop.f32.mrf.mxu0
      %v471 = vadd.f32 %v387, %v470
      %v472 = vpop.f32.mrf.mxu0
      %v473 = vpop.f32.mrf.mxu0
      %v474 = vadd.f32 %v387, %v473
      %v475 = vpop.f32.mrf.mxu0
      %476 = vmatprep.mubr.bf16.mxu0 0
      %477 = vmatmul.mubr.bf16.gmra.mxu0 %v359
      %v478 = vpop.f32.mrf.mxu0
      %v479 = vadd.f32 %v387, %v478
      %v480 = vpop.f32.mrf.mxu0
      %v481 = vpop.f32.mrf.mxu0
      %v482 = vadd.f32 %v387, %v481
      %v483 = vpop.f32.mrf.mxu0
      %484 = vmatprep.mubr.bf16.mxu0 0
      %485 = vmatmul.mubr.bf16.gmra.mxu0 %v360
      %v486 = vpop.f32.mrf.mxu0
      %v487 = vadd.f32 %v387, %v486
      %v488 = vpop.f32.mrf.mxu0
      %v489 = vpop.f32.mrf.mxu0
      %v490 = vadd.f32 %v387, %v489
      %v491 = vpop.f32.mrf.mxu0
      %492 = vmatprep.mubr.bf16.mxu0 0
      %493 = vmatmul.mubr.bf16.gmra.mxu0 %v361
      %v494 = vpop.f32.mrf.mxu0
      %v495 = vadd.f32 %v387, %v494
      %v496 = vpop.f32.mrf.mxu0
      %v497 = vpop.f32.mrf.mxu0
      %v498 = vadd.f32 %v387, %v497
      %v499 = vpop.f32.mrf.mxu0
      %500 = vmatprep.mubr.bf16.mxu0 0
      %501 = vmatmul.mubr.bf16.gmra.mxu0 %v362
      %v502 = vpop.f32.mrf.mxu0
      %v503 = vadd.f32 %v387, %v502
      %v504 = vpop.f32.mrf.mxu0
      %v505 = vpop.f32.mrf.mxu0
      %v506 = vadd.f32 %v387, %v505
      %v507 = vpop.f32.mrf.mxu0
      %508 = vmatprep.mubr.bf16.mxu0 0
      %509 = vmatmul.mubr.bf16.gmra.mxu0 %v363
      %v510 = vpop.f32.mrf.mxu0
      %v511 = vadd.f32 %v387, %v510
      %v512 = vpop.f32.mrf.mxu0
      %v513 = vpop.f32.mrf.mxu0
      %v514 = vadd.f32 %v387, %v513
      %v515 = vpop.f32.mrf.mxu0
      %516 = vmatprep.mubr.bf16.mxu0 0
      %517 = vmatmul.mubr.bf16.gmra.mxu0 %v364
      %v518 = vpop.f32.mrf.mxu0
      %v519 = vadd.f32 %v387, %v518
      %v520 = vpop.f32.mrf.mxu0
      %v521 = vpop.f32.mrf.mxu0
      %v522 = vadd.f32 %v387, %v521
      %v523 = vpop.f32.mrf.mxu0
      %524 = vmatprep.mubr.bf16.mxu0 0
      %525 = vmatmul.mubr.bf16.gmra.mxu0 %v365
      %v526 = vpop.f32.mrf.mxu0
      %v527 = vadd.f32 %v387, %v526
      %v528 = vpop.f32.mrf.mxu0
      %v529 = vpop.f32.mrf.mxu0
      %v530 = vadd.f32 %v387, %v529
      %v531 = vpop.f32.mrf.mxu0
      %532 = vdwg.mxu0
      %v533 = vmax.f32 %v471, 0.0
      %v534 = vmax.f32 %v474, 0.0
      %v535 = vmax.f32 %v479, 0.0
      %v536 = vmax.f32 %v482, 0.0
      %v537 = vmax.f32 %v487, 0.0
      %v538 = vmax.f32 %v490, 0.0
      %v539 = vmax.f32 %v495, 0.0
      %v540 = vmax.f32 %v498, 0.0
      %v541 = vmax.f32 %v503, 0.0
      %v542 = vmax.f32 %v506, 0.0
      %v543 = vmax.f32 %v511, 0.0
      %v544 = vmax.f32 %v514, 0.0
      %v545 = vmax.f32 %v519, 0.0
      %v546 = vmax.f32 %v522, 0.0
      %v547 = vmax.f32 %v527, 0.0
      %v548 = vmax.f32 %v530, 0.0
      %v549 = vpack.c.bf16 %v534, %v533
      %v550 = vpack.c.bf16 %v536, %v535
      %v551 = vpack.c.bf16 %v538, %v537
      %v552 = vpack.c.bf16 %v540, %v539
      %v553 = vpack.c.bf16 %v542, %v541
      %v554 = vpack.c.bf16 %v544, %v543
      %v555 = vpack.c.bf16 %v546, %v545
      %v556 = vpack.c.bf16 %v548, %v547
      %s557 = scalar_lea.vmem %s1, 128
      %v558 = vld [vmem:[%s557] sm:$0xf]
      %v559 = vld [vmem:[%s557 + $0x4] sm:$0xf]
      %v560 = vld [vmem:[%s557 + $0x8] sm:$0xf]
      %v561 = vld [vmem:[%s557 + $0xc] sm:$0xf]
      %v562 = vld [vmem:[%s557 + $0x10] sm:$0xf]
      %v563 = vld [vmem:[%s557 + $0x14] sm:$0xf]
      %v564 = vld [vmem:[%s557 + $0x18] sm:$0xf]
      %v565 = vld [vmem:[%s557 + $0x1c] sm:$0xf]
      %v566 = vld [vmem:[%s557 + $0x20] sm:$0xf]
      %v567 = vld [vmem:[%s557 + $0x24] sm:$0xf]
      %v568 = vld [vmem:[%s557 + $0x28] sm:$0xf]
      %v569 = vld [vmem:[%s557 + $0x2c] sm:$0xf]
      %v570 = vld [vmem:[%s557 + $0x30] sm:$0xf]
      %v571 = vld [vmem:[%s557 + $0x34] sm:$0xf]
      %v572 = vld [vmem:[%s557 + $0x38] sm:$0xf]
      %v573 = vld [vmem:[%s557 + $0x3c] sm:$0xf]
      %v574 = vld [vmem:[%s2 + $0x2] sm:$0x1]
      %v575 = vlaneseq
      %v576 = vshrl.u32 %v575, 7
      %v577 = vsub.s32 0, %v576
      %v578 = vrot.slane %v574, %v577
      %v595 = vunpack.c.l.b16 %v558
      %v596 = vunpack.c.l.b16 %v559
      %v597 = vunpack.c.l.b16 %v560
      %v598 = vunpack.c.l.b16 %v561
      %v599 = vunpack.c.l.b16 %v562
      %v600 = vunpack.c.l.b16 %v563
      %v601 = vunpack.c.l.b16 %v564
      %v602 = vunpack.c.l.b16 %v565
      %v603 = vunpack.c.l.b16 %v566
      %v604 = vunpack.c.l.b16 %v567
      %v605 = vunpack.c.l.b16 %v568
      %v606 = vunpack.c.l.b16 %v569
      %v607 = vunpack.c.l.b16 %v570
      %v608 = vunpack.c.l.b16 %v571
      %v609 = vunpack.c.l.b16 %v572
      %v610 = vunpack.c.l.b16 %v573
      %v611 = vpack.c.b16 %v596, %v595
      %v612 = vpack.c.b16 %v598, %v597
      %v613 = vpack.c.b16 %v600, %v599
      %v614 = vpack.c.b16 %v602, %v601
      %v615 = vpack.c.b16 %v604, %v603
      %v616 = vpack.c.b16 %v606, %v605
      %v617 = vpack.c.b16 %v608, %v607
      %v618 = vpack.c.b16 %v610, %v609
      %627 = vmatprep.subr.bf16.mxu0 0
      %628 = vmatpush1.bf16.msra.mxu0 %v618
      %629 = vmatprep.subr.bf16.mxu0 0
      %630 = vmatpush1.bf16.msra.mxu0 %v617
      %631 = vmatprep.subr.bf16.mxu0 0
      %632 = vmatpush1.bf16.msra.mxu0 %v616
      %633 = vmatprep.subr.bf16.mxu0 0
      %634 = vmatpush1.bf16.msra.mxu0 %v615
      %635 = vmatprep.subr.bf16.mxu0 0
      %636 = vmatpush1.bf16.msra.mxu0 %v614
      %637 = vmatprep.subr.bf16.mxu0 0
      %638 = vmatpush1.bf16.msra.mxu0 %v613
      %639 = vmatprep.subr.bf16.mxu0 0
      %640 = vmatpush1.bf16.msra.mxu0 %v612
      %641 = vmatprep.subr.bf16.mxu0 0
      %642 = vmatpush1.bf16.msra.mxu0 %v611
      %643 = vmatprep.subr.bf16.mxu0 0
      %644 = vmatpush2.bf16.msra.mxu0 0
      %645 = vmatprep.subr.bf16.mxu0 0
      %646 = vmatpush2.bf16.msra.mxu0 0
      %647 = vmatprep.subr.bf16.mxu0 0
      %648 = vmatpush2.bf16.msra.mxu0 0
      %649 = vmatprep.subr.bf16.mxu0 0
      %650 = vmatpush2.bf16.msra.mxu0 0
      %651 = vmatprep.subr.bf16.mxu0 0
      %652 = vmatpush2.bf16.msra.mxu0 0
      %653 = vmatprep.subr.bf16.mxu0 0
      %654 = vmatpush2.bf16.msra.mxu0 0
      %655 = vmatprep.subr.bf16.mxu0 0
      %656 = vmatpush2.bf16.msra.mxu0 0
      %657 = vmatprep.subr.bf16.mxu0 0
      %658 = vmatpush2.bf16.msra.mxu0 0
      %659 = vmatprep.mubr.bf16.mxu0 0
      %660 = vmatmul.mubr.bf16.gmra.mxu0 %v549
      %v661 = vpop.f32.mrf.mxu0
      %v662 = vadd.f32 %v578, %v661
      %v663 = vpop.f32.mrf.mxu0
      %v664 = vpop.f32.mrf.mxu0
      %v665 = vadd.f32 %v578, %v664
      %v666 = vpop.f32.mrf.mxu0
      %667 = vmatprep.mubr.bf16.mxu0 0
      %668 = vmatmul.mubr.bf16.gmra.mxu0 %v550
      %v669 = vpop.f32.mrf.mxu0
      %v670 = vadd.f32 %v578, %v669
      %v671 = vpop.f32.mrf.mxu0
      %v672 = vpop.f32.mrf.mxu0
      %v673 = vadd.f32 %v578, %v672
      %v674 = vpop.f32.mrf.mxu0
      %675 = vmatprep.mubr.bf16.mxu0 0
      %676 = vmatmul.mubr.bf16.gmra.mxu0 %v551
      %v677 = vpop.f32.mrf.mxu0
      %v678 = vadd.f32 %v578, %v677
      %v679 = vpop.f32.mrf.mxu0
      %v680 = vpop.f32.mrf.mxu0
      %v681 = vadd.f32 %v578, %v680
      %v682 = vpop.f32.mrf.mxu0
      %683 = vmatprep.mubr.bf16.mxu0 0
      %684 = vmatmul.mubr.bf16.gmra.mxu0 %v552
      %v685 = vpop.f32.mrf.mxu0
      %v686 = vadd.f32 %v578, %v685
      %v687 = vpop.f32.mrf.mxu0
      %v688 = vpop.f32.mrf.mxu0
      %v689 = vadd.f32 %v578, %v688
      %v690 = vpop.f32.mrf.mxu0
      %691 = vmatprep.mubr.bf16.mxu0 0
      %692 = vmatmul.mubr.bf16.gmra.mxu0 %v553
      %v693 = vpop.f32.mrf.mxu0
      %v694 = vadd.f32 %v578, %v693
      %v695 = vpop.f32.mrf.mxu0
      %v696 = vpop.f32.mrf.mxu0
      %v697 = vadd.f32 %v578, %v696
      %v698 = vpop.f32.mrf.mxu0
      %699 = vmatprep.mubr.bf16.mxu0 0
      %700 = vmatmul.mubr.bf16.gmra.mxu0 %v554
      %v701 = vpop.f32.mrf.mxu0
      %v702 = vadd.f32 %v578, %v701
      %v703 = vpop.f32.mrf.mxu0
      %v704 = vpop.f32.mrf.mxu0
      %v705 = vadd.f32 %v578, %v704
      %v706 = vpop.f32.mrf.mxu0
      %707 = vmatprep.mubr.bf16.mxu0 0
      %708 = vmatmul.mubr.bf16.gmra.mxu0 %v555
      %v709 = vpop.f32.mrf.mxu0
      %v710 = vadd.f32 %v578, %v709
      %v711 = vpop.f32.mrf.mxu0
      %v712 = vpop.f32.mrf.mxu0
      %v713 = vadd.f32 %v578, %v712
      %v714 = vpop.f32.mrf.mxu0
      %715 = vmatprep.mubr.bf16.mxu0 0
      %716 = vmatmul.mubr.bf16.gmra.mxu0 %v556
      %v717 = vpop.f32.mrf.mxu0
      %v718 = vadd.f32 %v578, %v717
      %v719 = vpop.f32.mrf.mxu0
      %v720 = vpop.f32.mrf.mxu0
      %v721 = vadd.f32 %v578, %v720
      %v722 = vpop.f32.mrf.mxu0
      %723 = vdwg.mxu0
      %v724 = vmax.f32 %v662, 0.0
      %v725 = vmax.f32 %v665, 0.0
      %v726 = vmax.f32 %v670, 0.0
      %v727 = vmax.f32 %v673, 0.0
      %v728 = vmax.f32 %v678, 0.0
      %v729 = vmax.f32 %v681, 0.0
      %v730 = vmax.f32 %v686, 0.0
      %v731 = vmax.f32 %v689, 0.0
      %v732 = vmax.f32 %v694, 0.0
      %v733 = vmax.f32 %v697, 0.0
      %v734 = vmax.f32 %v702, 0.0
      %v735 = vmax.f32 %v705, 0.0
      %v736 = vmax.f32 %v710, 0.0
      %v737 = vmax.f32 %v713, 0.0
      %v738 = vmax.f32 %v718, 0.0
      %v739 = vmax.f32 %v721, 0.0
      %v740 = vpack.c.bf16 %v725, %v724
      %v741 = vpack.c.bf16 %v727, %v726
      %v742 = vpack.c.bf16 %v729, %v728
      %v743 = vpack.c.bf16 %v731, %v730
      %v744 = vpack.c.bf16 %v733, %v732
      %v745 = vpack.c.bf16 %v735, %v734
      %v746 = vpack.c.bf16 %v737, %v736
      %v747 = vpack.c.bf16 %v739, %v738
      %s748 = scalar_lea.vmem %s1, 192
      %v749 = vld [vmem:[%s748] sm:$0xf]
      %v750 = vld [vmem:[%s748 + $0x4] sm:$0xf]
      %v751 = vld [vmem:[%s748 + $0x8] sm:$0xf]
      %v752 = vld [vmem:[%s748 + $0xc] sm:$0xf]
      %v753 = vld [vmem:[%s748 + $0x10] sm:$0xf]
      %v754 = vld [vmem:[%s748 + $0x14] sm:$0xf]
      %v755 = vld [vmem:[%s748 + $0x18] sm:$0xf]
      %v756 = vld [vmem:[%s748 + $0x1c] sm:$0xf]
      %v757 = vld [vmem:[%s748 + $0x20] sm:$0xf]
      %v758 = vld [vmem:[%s748 + $0x24] sm:$0xf]
      %v759 = vld [vmem:[%s748 + $0x28] sm:$0xf]
      %v760 = vld [vmem:[%s748 + $0x2c] sm:$0xf]
      %v761 = vld [vmem:[%s748 + $0x30] sm:$0xf]
      %v762 = vld [vmem:[%s748 + $0x34] sm:$0xf]
      %v763 = vld [vmem:[%s748 + $0x38] sm:$0xf]
      %v764 = vld [vmem:[%s748 + $0x3c] sm:$0xf]
      %v765 = vld [vmem:[%s2 + $0x3] sm:$0x1]
      %v766 = vlaneseq
      %v767 = vshrl.u32 %v766, 7
      %v768 = vsub.s32 0, %v767
      %v769 = vrot.slane %v765, %v768
      %v786 = vunpack.c.l.b16 %v749
      %v787 = vunpack.c.l.b16 %v750
      %v788 = vunpack.c.l.b16 %v751
      %v789 = vunpack.c.l.b16 %v752
      %v790 = vunpack.c.l.b16 %v753
      %v791 = vunpack.c.l.b16 %v754
      %v792 = vunpack.c.l.b16 %v755
      %v793 = vunpack.c.l.b16 %v756
      %v794 = vunpack.c.l.b16 %v757
      %v795 = vunpack.c.l.b16 %v758
      %v796 = vunpack.c.l.b16 %v759
      %v797 = vunpack.c.l.b16 %v760
      %v798 = vunpack.c.l.b16 %v761
      %v799 = vunpack.c.l.b16 %v762
      %v800 = vunpack.c.l.b16 %v763
      %v801 = vunpack.c.l.b16 %v764
      %v802 = vpack.c.b16 %v787, %v786
      %v803 = vpack.c.b16 %v789, %v788
      %v804 = vpack.c.b16 %v791, %v790
      %v805 = vpack.c.b16 %v793, %v792
      %v806 = vpack.c.b16 %v795, %v794
      %v807 = vpack.c.b16 %v797, %v796
      %v808 = vpack.c.b16 %v799, %v798
      %v809 = vpack.c.b16 %v801, %v800
      %818 = vmatprep.subr.bf16.mxu0 0
      %819 = vmatpush1.bf16.msra.mxu0 %v809
      %820 = vmatprep.subr.bf16.mxu0 0
      %821 = vmatpush1.bf16.msra.mxu0 %v808
      %822 = vmatprep.subr.bf16.mxu0 0
      %823 = vmatpush1.bf16.msra.mxu0 %v807
      %824 = vmatprep.subr.bf16.mxu0 0
      %825 = vmatpush1.bf16.msra.mxu0 %v806
      %826 = vmatprep.subr.bf16.mxu0 0
      %827 = vmatpush1.bf16.msra.mxu0 %v805
      %828 = vmatprep.subr.bf16.mxu0 0
      %829 = vmatpush1.bf16.msra.mxu0 %v804
      %830 = vmatprep.subr.bf16.mxu0 0
      %831 = vmatpush1.bf16.msra.mxu0 %v803
      %832 = vmatprep.subr.bf16.mxu0 0
      %833 = vmatpush1.bf16.msra.mxu0 %v802
      %834 = vmatprep.subr.bf16.mxu0 0
      %835 = vmatpush2.bf16.msra.mxu0 0
      %836 = vmatprep.subr.bf16.mxu0 0
      %837 = vmatpush2.bf16.msra.mxu0 0
      %838 = vmatprep.subr.bf16.mxu0 0
      %839 = vmatpush2.bf16.msra.mxu0 0
      %840 = vmatprep.subr.bf16.mxu0 0
      %841 = vmatpush2.bf16.msra.mxu0 0
      %842 = vmatprep.subr.bf16.mxu0 0
      %843 = vmatpush2.bf16.msra.mxu0 0
      %844 = vmatprep.subr.bf16.mxu0 0
      %845 = vmatpush2.bf16.msra.mxu0 0
      %846 = vmatprep.subr.bf16.mxu0 0
      %847 = vmatpush2.bf16.msra.mxu0 0
      %848 = vmatprep.subr.bf16.mxu0 0
      %849 = vmatpush2.bf16.msra.mxu0 0
      %850 = vmatprep.mubr.bf16.mxu0 0
      %851 = vmatmul.mubr.bf16.gmra.mxu0 %v740
      %v852 = vpop.f32.mrf.mxu0
      %v853 = vadd.f32 %v769, %v852
      %v854 = vpop.f32.mrf.mxu0
      %v855 = vpop.f32.mrf.mxu0
      %v856 = vadd.f32 %v769, %v855
      %v857 = vpop.f32.mrf.mxu0
      %858 = vmatprep.mubr.bf16.mxu0 0
      %859 = vmatmul.mubr.bf16.gmra.mxu0 %v741
      %v860 = vpop.f32.mrf.mxu0
      %v861 = vadd.f32 %v769, %v860
      %v862 = vpop.f32.mrf.mxu0
      %v863 = vpop.f32.mrf.mxu0
      %v864 = vadd.f32 %v769, %v863
      %v865 = vpop.f32.mrf.mxu0
      %866 = vmatprep.mubr.bf16.mxu0 0
      %867 = vmatmul.mubr.bf16.gmra.mxu0 %v742
      %v868 = vpop.f32.mrf.mxu0
      %v869 = vadd.f32 %v769, %v868
      %v870 = vpop.f32.mrf.mxu0
      %v871 = vpop.f32.mrf.mxu0
      %v872 = vadd.f32 %v769, %v871
      %v873 = vpop.f32.mrf.mxu0
      %874 = vmatprep.mubr.bf16.mxu0 0
      %875 = vmatmul.mubr.bf16.gmra.mxu0 %v743
      %v876 = vpop.f32.mrf.mxu0
      %v877 = vadd.f32 %v769, %v876
      %v878 = vpop.f32.mrf.mxu0
      %v879 = vpop.f32.mrf.mxu0
      %v880 = vadd.f32 %v769, %v879
      %v881 = vpop.f32.mrf.mxu0
      %882 = vmatprep.mubr.bf16.mxu0 0
      %883 = vmatmul.mubr.bf16.gmra.mxu0 %v744
      %v884 = vpop.f32.mrf.mxu0
      %v885 = vadd.f32 %v769, %v884
      %v886 = vpop.f32.mrf.mxu0
      %v887 = vpop.f32.mrf.mxu0
      %v888 = vadd.f32 %v769, %v887
      %v889 = vpop.f32.mrf.mxu0
      %890 = vmatprep.mubr.bf16.mxu0 0
      %891 = vmatmul.mubr.bf16.gmra.mxu0 %v745
      %v892 = vpop.f32.mrf.mxu0
      %v893 = vadd.f32 %v769, %v892
      %v894 = vpop.f32.mrf.mxu0
      %v895 = vpop.f32.mrf.mxu0
      %v896 = vadd.f32 %v769, %v895
      %v897 = vpop.f32.mrf.mxu0
      %898 = vmatprep.mubr.bf16.mxu0 0
      %899 = vmatmul.mubr.bf16.gmra.mxu0 %v746
      %v900 = vpop.f32.mrf.mxu0
      %v901 = vadd.f32 %v769, %v900
      %v902 = vpop.f32.mrf.mxu0
      %v903 = vpop.f32.mrf.mxu0
      %v904 = vadd.f32 %v769, %v903
      %v905 = vpop.f32.mrf.mxu0
      %906 = vmatprep.mubr.bf16.mxu0 0
      %907 = vmatmul.mubr.bf16.gmra.mxu0 %v747
      %v908 = vpop.f32.mrf.mxu0
      %v909 = vadd.f32 %v769, %v908
      %v910 = vpop.f32.mrf.mxu0
      %v911 = vpop.f32.mrf.mxu0
      %v912 = vadd.f32 %v769, %v911
      %v913 = vpop.f32.mrf.mxu0
      %914 = vdwg.mxu0
      %v915 = vmax.f32 %v853, 0.0
      %v916 = vmax.f32 %v856, 0.0
      %v917 = vmax.f32 %v861, 0.0
      %v918 = vmax.f32 %v864, 0.0
      %v919 = vmax.f32 %v869, 0.0
      %v920 = vmax.f32 %v872, 0.0
      %v921 = vmax.f32 %v877, 0.0
      %v922 = vmax.f32 %v880, 0.0
      %v923 = vmax.f32 %v885, 0.0
      %v924 = vmax.f32 %v888, 0.0
      %v925 = vmax.f32 %v893, 0.0
      %v926 = vmax.f32 %v896, 0.0
      %v927 = vmax.f32 %v901, 0.0
      %v928 = vmax.f32 %v904, 0.0
      %v929 = vmax.f32 %v909, 0.0
      %v930 = vmax.f32 %v912, 0.0
      %v931 = vpack.c.bf16 %v916, %v915
      %v932 = vpack.c.bf16 %v918, %v917
      %v933 = vpack.c.bf16 %v920, %v919
      %v934 = vpack.c.bf16 %v922, %v921
      %v935 = vpack.c.bf16 %v924, %v923
      %v936 = vpack.c.bf16 %v926, %v925
      %v937 = vpack.c.bf16 %v928, %v927
      %v938 = vpack.c.bf16 %v930, %v929
      %s939 = scalar_lea.vmem %s1, 256
      %v940 = vld [vmem:[%s939] sm:$0xf]
      %v941 = vld [vmem:[%s939 + $0x4] sm:$0xf]
      %v942 = vld [vmem:[%s939 + $0x8] sm:$0xf]
      %v943 = vld [vmem:[%s939 + $0xc] sm:$0xf]
      %v944 = vld [vmem:[%s939 + $0x10] sm:$0xf]
      %v945 = vld [vmem:[%s939 + $0x14] sm:$0xf]
      %v946 = vld [vmem:[%s939 + $0x18] sm:$0xf]
      %v947 = vld [vmem:[%s939 + $0x1c] sm:$0xf]
      %v948 = vld [vmem:[%s939 + $0x20] sm:$0xf]
      %v949 = vld [vmem:[%s939 + $0x24] sm:$0xf]
      %v950 = vld [vmem:[%s939 + $0x28] sm:$0xf]
      %v951 = vld [vmem:[%s939 + $0x2c] sm:$0xf]
      %v952 = vld [vmem:[%s939 + $0x30] sm:$0xf]
      %v953 = vld [vmem:[%s939 + $0x34] sm:$0xf]
      %v954 = vld [vmem:[%s939 + $0x38] sm:$0xf]
      %v955 = vld [vmem:[%s939 + $0x3c] sm:$0xf]
      %v956 = vld [vmem:[%s2 + $0x4] sm:$0x1]
      %v957 = vlaneseq
      %v958 = vshrl.u32 %v957, 7
      %v959 = vsub.s32 0, %v958
      %v960 = vrot.slane %v956, %v959
      %v977 = vunpack.c.l.b16 %v940
      %v978 = vunpack.c.l.b16 %v941
      %v979 = vunpack.c.l.b16 %v942
      %v980 = vunpack.c.l.b16 %v943
      %v981 = vunpack.c.l.b16 %v944
      %v982 = vunpack.c.l.b16 %v945
      %v983 = vunpack.c.l.b16 %v946
      %v984 = vunpack.c.l.b16 %v947
      %v985 = vunpack.c.l.b16 %v948
      %v986 = vunpack.c.l.b16 %v949
      %v987 = vunpack.c.l.b16 %v950
      %v988 = vunpack.c.l.b16 %v951
      %v989 = vunpack.c.l.b16 %v952
      %v990 = vunpack.c.l.b16 %v953
      %v991 = vunpack.c.l.b16 %v954
      %v992 = vunpack.c.l.b16 %v955
      %v993 = vpack.c.b16 %v978, %v977
      %v994 = vpack.c.b16 %v980, %v979
      %v995 = vpack.c.b16 %v982, %v981
      %v996 = vpack.c.b16 %v984, %v983
      %v997 = vpack.c.b16 %v986, %v985
      %v998 = vpack.c.b16 %v988, %v987
      %v999 = vpack.c.b16 %v990, %v989
      %v1000 = vpack.c.b16 %v992, %v991
      %1009 = vmatprep.subr.bf16.mxu0 0
      %1010 = vmatpush1.bf16.msra.mxu0 %v1000
      %1011 = vmatprep.subr.bf16.mxu0 0
      %1012 = vmatpush1.bf16.msra.mxu0 %v999
      %1013 = vmatprep.subr.bf16.mxu0 0
      %1014 = vmatpush1.bf16.msra.mxu0 %v998
      %1015 = vmatprep.subr.bf16.mxu0 0
      %1016 = vmatpush1.bf16.msra.mxu0 %v997
      %1017 = vmatprep.subr.bf16.mxu0 0
      %1018 = vmatpush1.bf16.msra.mxu0 %v996
      %1019 = vmatprep.subr.bf16.mxu0 0
      %1020 = vmatpush1.bf16.msra.mxu0 %v995
      %1021 = vmatprep.subr.bf16.mxu0 0
      %1022 = vmatpush1.bf16.msra.mxu0 %v994
      %1023 = vmatprep.subr.bf16.mxu0 0
      %1024 = vmatpush1.bf16.msra.mxu0 %v993
      %1025 = vmatprep.subr.bf16.mxu0 0
      %1026 = vmatpush2.bf16.msra.mxu0 0
      %1027 = vmatprep.subr.bf16.mxu0 0
      %1028 = vmatpush2.bf16.msra.mxu0 0
      %1029 = vmatprep.subr.bf16.mxu0 0
      %1030 = vmatpush2.bf16.msra.mxu0 0
      %1031 = vmatprep.subr.bf16.mxu0 0
      %1032 = vmatpush2.bf16.msra.mxu0 0
      %1033 = vmatprep.subr.bf16.mxu0 0
      %1034 = vmatpush2.bf16.msra.mxu0 0
      %1035 = vmatprep.subr.bf16.mxu0 0
      %1036 = vmatpush2.bf16.msra.mxu0 0
      %1037 = vmatprep.subr.bf16.mxu0 0
      %1038 = vmatpush2.bf16.msra.mxu0 0
      %1039 = vmatprep.subr.bf16.mxu0 0
      %1040 = vmatpush2.bf16.msra.mxu0 0
      %1041 = vmatprep.mubr.bf16.mxu0 0
      %1042 = vmatmul.mubr.bf16.gmra.mxu0 %v931
      %v1043 = vpop.f32.mrf.mxu0
      %v1044 = vadd.f32 %v960, %v1043
      %v1045 = vpop.f32.mrf.mxu0
      %v1046 = vpop.f32.mrf.mxu0
      %v1047 = vadd.f32 %v960, %v1046
      %v1048 = vpop.f32.mrf.mxu0
      %1049 = vmatprep.mubr.bf16.mxu0 0
      %1050 = vmatmul.mubr.bf16.gmra.mxu0 %v932
      %v1051 = vpop.f32.mrf.mxu0
      %v1052 = vadd.f32 %v960, %v1051
      %v1053 = vpop.f32.mrf.mxu0
      %v1054 = vpop.f32.mrf.mxu0
      %v1055 = vadd.f32 %v960, %v1054
      %v1056 = vpop.f32.mrf.mxu0
      %1057 = vmatprep.mubr.bf16.mxu0 0
      %1058 = vmatmul.mubr.bf16.gmra.mxu0 %v933
      %v1059 = vpop.f32.mrf.mxu0
      %v1060 = vadd.f32 %v960, %v1059
      %v1061 = vpop.f32.mrf.mxu0
      %v1062 = vpop.f32.mrf.mxu0
      %v1063 = vadd.f32 %v960, %v1062
      %v1064 = vpop.f32.mrf.mxu0
      %1065 = vmatprep.mubr.bf16.mxu0 0
      %1066 = vmatmul.mubr.bf16.gmra.mxu0 %v934
      %v1067 = vpop.f32.mrf.mxu0
      %v1068 = vadd.f32 %v960, %v1067
      %v1069 = vpop.f32.mrf.mxu0
      %v1070 = vpop.f32.mrf.mxu0
      %v1071 = vadd.f32 %v960, %v1070
      %v1072 = vpop.f32.mrf.mxu0
      %1073 = vmatprep.mubr.bf16.mxu0 0
      %1074 = vmatmul.mubr.bf16.gmra.mxu0 %v935
      %v1075 = vpop.f32.mrf.mxu0
      %v1076 = vadd.f32 %v960, %v1075
      %v1077 = vpop.f32.mrf.mxu0
      %v1078 = vpop.f32.mrf.mxu0
      %v1079 = vadd.f32 %v960, %v1078
      %v1080 = vpop.f32.mrf.mxu0
      %1081 = vmatprep.mubr.bf16.mxu0 0
      %1082 = vmatmul.mubr.bf16.gmra.mxu0 %v936
      %v1083 = vpop.f32.mrf.mxu0
      %v1084 = vadd.f32 %v960, %v1083
      %v1085 = vpop.f32.mrf.mxu0
      %v1086 = vpop.f32.mrf.mxu0
      %v1087 = vadd.f32 %v960, %v1086
      %v1088 = vpop.f32.mrf.mxu0
      %1089 = vmatprep.mubr.bf16.mxu0 0
      %1090 = vmatmul.mubr.bf16.gmra.mxu0 %v937
      %v1091 = vpop.f32.mrf.mxu0
      %v1092 = vadd.f32 %v960, %v1091
      %v1093 = vpop.f32.mrf.mxu0
      %v1094 = vpop.f32.mrf.mxu0
      %v1095 = vadd.f32 %v960, %v1094
      %v1096 = vpop.f32.mrf.mxu0
      %1097 = vmatprep.mubr.bf16.mxu0 0
      %1098 = vmatmul.mubr.bf16.gmra.mxu0 %v938
      %v1099 = vpop.f32.mrf.mxu0
      %v1100 = vadd.f32 %v960, %v1099
      %v1101 = vpop.f32.mrf.mxu0
      %v1102 = vpop.f32.mrf.mxu0
      %v1103 = vadd.f32 %v960, %v1102
      %v1104 = vpop.f32.mrf.mxu0
      %1105 = vdwg.mxu0
      %v1106 = vpack.c.bf16 %v1047, %v1044
      %v1107 = vpack.c.bf16 %v1055, %v1052
      %v1108 = vpack.c.bf16 %v1063, %v1060
      %v1109 = vpack.c.bf16 %v1071, %v1068
      %v1110 = vpack.c.bf16 %v1079, %v1076
      %v1111 = vpack.c.bf16 %v1087, %v1084
      %v1112 = vpack.c.bf16 %v1095, %v1092
      %v1113 = vpack.c.bf16 %v1103, %v1100
      %v1122 = vunpack.c.l.b16 %v1106
      %v1123 = vunpack.c.h.b16 %v1106
      %v1124 = vunpack.c.l.b16 %v1107
      %v1125 = vunpack.c.h.b16 %v1107
      %v1126 = vunpack.c.l.b16 %v1108
      %v1127 = vunpack.c.h.b16 %v1108
      %v1128 = vunpack.c.l.b16 %v1109
      %v1129 = vunpack.c.h.b16 %v1109
      %v1130 = vunpack.c.l.b16 %v1110
      %v1131 = vunpack.c.h.b16 %v1110
      %v1132 = vunpack.c.l.b16 %v1111
      %v1133 = vunpack.c.h.b16 %v1111
      %v1134 = vunpack.c.l.b16 %v1112
      %v1135 = vunpack.c.h.b16 %v1112
      %v1136 = vunpack.c.l.b16 %v1113
      %v1137 = vunpack.c.h.b16 %v1113
      %v1138 = vpack.c.b16 %v1122, %v1122
      %v1139 = vpack.c.b16 %v1123, %v1123
      %v1140 = vpack.c.b16 %v1124, %v1124
      %v1141 = vpack.c.b16 %v1125, %v1125
      %v1142 = vpack.c.b16 %v1126, %v1126
      %v1143 = vpack.c.b16 %v1127, %v1127
      %v1144 = vpack.c.b16 %v1128, %v1128
      %v1145 = vpack.c.b16 %v1129, %v1129
      %v1146 = vpack.c.b16 %v1130, %v1130
      %v1147 = vpack.c.b16 %v1131, %v1131
      %v1148 = vpack.c.b16 %v1132, %v1132
      %v1149 = vpack.c.b16 %v1133, %v1133
      %v1150 = vpack.c.b16 %v1134, %v1134
      %v1151 = vpack.c.b16 %v1135, %v1135
      %v1152 = vpack.c.b16 %v1136, %v1136
      %v1153 = vpack.c.b16 %v1137, %v1137
      %1170 = vst [vmem:[%s172] sm:$0xf] %v1138
      %1171 = vst [vmem:[%s172 + $0x4] sm:$0xf] %v1139
      %1172 = vst [vmem:[%s172 + $0x8] sm:$0xf] %v1140
      %1173 = vst [vmem:[%s172 + $0xc] sm:$0xf] %v1141
      %1174 = vst [vmem:[%s172 + $0x10] sm:$0xf] %v1142
      %1175 = vst [vmem:[%s172 + $0x14] sm:$0xf] %v1143
      %1176 = vst [vmem:[%s172 + $0x18] sm:$0xf] %v1144
      %1177 = vst [vmem:[%s172 + $0x1c] sm:$0xf] %v1145
      %1178 = vst [vmem:[%s172 + $0x20] sm:$0xf] %v1146
      %1179 = vst [vmem:[%s172 + $0x24] sm:$0xf] %v1147
      %1180 = vst [vmem:[%s172 + $0x28] sm:$0xf] %v1148
      %1181 = vst [vmem:[%s172 + $0x2c] sm:$0xf] %v1149
      %1182 = vst [vmem:[%s172 + $0x30] sm:$0xf] %v1150
      %1183 = vst [vmem:[%s172 + $0x34] sm:$0xf] %v1151
      %1184 = vst [vmem:[%s172 + $0x38] sm:$0xf] %v1152
      %1185 = vst [vmem:[%s172 + $0x3c] sm:$0xf] %v1153
      %s1186 = smul.u32 16, %s14
      %p1187 = scmp.lt.s32.totalorder %s1186, 31
      %s1188 = scalar_select %p1187, %s1186, 31
      %s1189 = smul.addr %s1188, 4
      %s1190 = scalar_lea.vmem %s3, %s1189
      // Predicated region
      $region33: #{nbeats_block.1} parent=31 // pred_check
        %p1191 = pneg %p100
      $region34: #{nbeats_block.1} parent=31 // pred_check_branch
        %1193 = sbr.rel (%p1191) target = $region36
      $region35: #{nbeats_block.1} parent=31 // pred_region
        %s1194 = smul.u32 16, %s14
      $region36: #{nbeats_block.1} parent=31 // pred_fallthru
        _
    $region32: #{nbeats_block.1} parent=5 // pred_fallthru
      _
    %p1195 = scmp.le.s32.totalorder 2, %s9
    // Predicated region
    $region37: #{nbeats_block.1} parent=5 // pred_check
      %p1196 = pneg %p1195
    $region38: #{nbeats_block.1} parent=5 // pred_check_branch
      %1198 = sbr.rel (%p1196) target = $region40
    $region39: #{nbeats_block.1} parent=5 // pred_region
      %s1199 = ssub.s32 %s9, 2
      // Predicated region
      $region41: #{nbeats_block.1} parent=39 // pred_check
        %p1200 = pneg %p106
      $region42: #{nbeats_block.1} parent=39 // pred_check_branch
        %1202 = sbr.rel (%p1200) target = $region44
      $region43: #{nbeats_block.1} parent=39 // pred_region
        %s1203 = smul.u32 16, %s15
        %p1204 = scmp.lt.s32.totalorder %s1203, 31
        %s1205 = scalar_select %p1204, %s1203, 31
        %s1206 = smul.addr %s1205, 4
        %s1207 = scalar_lea.vmem %s3, %s1206
      $region44: #{nbeats_block.1} parent=39 // pred_fallthru
        _
    $region40: #{nbeats_block.1} parent=5 // pred_fallthru
      _
  $region6: #{nbeats_block.1} parent=0 // loop_footer
    %s13 = sadd.s32 1, %s9
  $region7: #{nbeats_block.1} parent=0 // loop_footer_branch
    %8 = sbr.rel target = $region3
  $region8: #{nbeats_block.1} parent=0 // loop_exit
    _

</llo_original>
